<compile_context>
chip_gen: v6e
topology: v6e:2x2x1
jax: 0.10.0
libtpu: 0.0.40
codegen_flags: <defaults>
</compile_context>

<pallas_src>
import functools
import math

import jax
import jax.numpy as jnp
from jax import lax
from jax.experimental import pallas as pl
from jax.experimental.pallas import tpu as pltpu


# --------------------------- tiled matmul (Linear) ---------------------------

def _matmul_kernel(x_ref, w_ref, o_ref, acc_ref):
    @pl.when(pl.program_id(2) == 0)
    def _init():
        acc_ref[...] = jnp.zeros_like(acc_ref)

    acc_ref[...] += jnp.dot(
        x_ref[...], w_ref[...], preferred_element_type=jnp.float32
    )

    @pl.when(pl.program_id(2) == pl.num_programs(2) - 1)
    def _finalize():
        o_ref[...] = acc_ref[...].astype(o_ref.dtype)


def _pick_tile(n, preferred):
    """Largest tile <= preferred that divides n (prefers multiples of 128)."""
    if n <= preferred:
        return n
    if n % preferred == 0:
        return preferred
    for t in range(preferred, 127, -128):
        if n % t == 0:
            return t
    return n


def matmul(x, w, *, tm=256, tn=256, tk=512):
    """y = x @ w  with x: (M, K), w: (K, N).  Weights are pre-transposed."""
    M, K = x.shape
    K2, N = w.shape
    assert K == K2
    tm, tn, tk = _pick_tile(M, tm), _pick_tile(N, tn), _pick_tile(K, tk)
    return pl.pallas_call(
        _matmul_kernel,
        out_shape=jax.ShapeDtypeStruct((M, N), x.dtype),
        grid=(M // tm, N // tn, K // tk),
        in_specs=[
            pl.BlockSpec((tm, tk), lambda i, j, k: (i, k)),
            pl.BlockSpec((tk, tn), lambda i, j, k: (k, j)),
        ],
        out_specs=pl.BlockSpec((tm, tn), lambda i, j, k: (i, j)),
        scratch_shapes=[pltpu.VMEM((tm, tn), jnp.float32)],
        compiler_params=pltpu.CompilerParams(
            dimension_semantics=("parallel", "parallel", "arbitrary")
        ),
    )(x, w)


# ------------------------- multi-head attention kernel -----------------------

def _mha_kernel(*refs, scale, n_heads, d_k, fused, has_bias, return_attn):
    idx = 0
    if fused:
        qkv_ref = refs[idx]
        idx += 1
        d_model = n_heads * d_k

        def head_slice(which, h):
            off = which * d_model + h * d_k
            return qkv_ref[:, off:off + d_k]
    else:
        srcs = (refs[idx], refs[idx + 1], refs[idx + 2])
        idx += 3

        def head_slice(which, h):
            off = h * d_k
            return srcs[which][:, off:off + d_k]

    bias_ref = None
    if has_bias:
        bias_ref = refs[idx]
        idx += 1
    o_ref = refs[idx]
    idx += 1
    attn_ref = refs[idx] if return_attn else None

    bias = bias_ref[...].astype(jnp.float32) if has_bias else None   # (S, S)

    # All heads of one batch element per grid step (unrolled, n_heads static).
    for h in range(n_heads):
        q = head_slice(0, h) * scale                                  # (S, d_k)
        k = head_slice(1, h)                                          # (S, d_k)
        v = head_slice(2, h)                                          # (S, d_k)
        # QK^T contracting last dims of both operands (no explicit k.T).
        s = lax.dot_general(
            q, k, (((1,), (1,)), ((), ())), preferred_element_type=jnp.float32
        )                                                             # (S, S)
        if bias is not None:
            s = s + bias
        m = jnp.max(s, axis=-1, keepdims=True)
        e = jnp.exp(s - m)
        denom = jnp.sum(e, axis=-1, keepdims=True)
        p = e * pl.reciprocal(denom, approx=False)                    # softmax
        # dropout(p_attn) is identity in eval mode.
        o = jnp.dot(p.astype(v.dtype), v, preferred_element_type=jnp.float32)
        o_ref[:, h * d_k:(h + 1) * d_k] = o.astype(o_ref.dtype)
        if attn_ref is not None:
            attn_ref[h, :, :] = p.astype(attn_ref.dtype)


def mha_attention(inputs, bias, *, B, S, n_heads, d_k, fused, return_attn,
                  out_dtype):
    d_model = n_heads * d_k
    scale = 1.0 / math.sqrt(d_k)

    args = list(inputs)
    if fused:
        in_specs = [pl.BlockSpec((None, S, 3 * d_model), lambda b: (b, 0, 0))]
    else:
        in_specs = [pl.BlockSpec((None, S, d_model), lambda b: (b, 0, 0))
                    for _ in range(3)]

    has_bias = bias is not None
    if has_bias:
        if bias.ndim == 2:           # shared additive mask bias
            in_specs.append(pl.BlockSpec((S, S), lambda b: (0, 0)))
        else:                        # per-batch additive mask bias (B, S, S)
            in_specs.append(pl.BlockSpec((None, S, S), lambda b: (b, 0, 0)))
        args.append(bias)

    out_shape = [jax.ShapeDtypeStruct((B, S, d_model), out_dtype)]
    out_specs = [pl.BlockSpec((None, S, d_model), lambda b: (b, 0, 0))]
    if return_attn:
        out_shape.append(jax.ShapeDtypeStruct((B, n_heads, S, S), jnp.float32))
        out_specs.append(
            pl.BlockSpec((None, n_heads, S, S), lambda b: (b, 0, 0, 0)))

    kernel = functools.partial(
        _mha_kernel, scale=scale, n_heads=n_heads, d_k=d_k,
        fused=fused, has_bias=has_bias, return_attn=return_attn,
    )
    outs = pl.pallas_call(
        kernel,
        out_shape=tuple(out_shape),
        grid=(B,),
        in_specs=in_specs,
        out_specs=tuple(out_specs),
        compiler_params=pltpu.CompilerParams(dimension_semantics=("parallel",)),
    )(*args)
    x = outs[0]
    attn = outs[1] if return_attn else None
    return x, attn


# ------------------------------ Module wrapper -------------------------------

class MultiheadAttentionPallas:
    """Mirrors MultiheadAttention(d_model, h, dropout, seq_len, de_type='none_0')."""

    def __init__(self, d_model, h, dropout, seq_len, key, de_type="none_0"):
        assert d_model % h == 0
        self.d_model = d_model
        self.h = h
        self.d_k = d_model // h
        self.dropout = dropout          # nn.Dropout is identity at inference.
        self.de_type = de_type
        # TODO(synk): rotary / alibi / relative de_type branches not implemented
        # (module default de_type='none_0' path only).
        bound = math.sqrt(6.0 / (d_model + d_model))
        keys = jax.random.split(key, 4)
        self.weights = [
            jax.random.uniform(k, (d_model, d_model), jnp.float32,
                               minval=-bound, maxval=bound)
            for k in keys
        ]
        # Pre-transposed weights (kernel computes x @ W) plus a fused QKV
        # weight for the self-attention fast path.
        self.w_q_t, self.w_k_t, self.w_v_t = (w.T for w in self.weights[:3])
        self.w_qkv_t = jnp.concatenate(
            [self.w_q_t, self.w_k_t, self.w_v_t], axis=1)   # (D, 3D)
        self.w_o_t = self.weights[3].T

    def _mask_to_bias(self, mask, B, S):
        mask = jnp.asarray(mask)
        lead = 1
        for d in mask.shape[:-2]:
            lead *= d
        # TODO(synk): per-head masks (shape (B, H, S, S) with H > 1) unsupported.
        assert lead in (1, B), "mask must broadcast over heads"
        bias = jnp.where(mask == 0, jnp.float32(-1e9), jnp.float32(0.0))
        bias = bias.reshape((lead, S, S))
        if lead == 1:
            bias = bias.reshape((S, S))
        return bias.astype(jnp.float32)

    def __call__(self, query, key, value, mask=None, return_attn=True):
        B, S, D = query.shape
        if (query is key) and (query is value):
            # Fused QKV projection: one matmul, activation streamed once.
            qkv = matmul(query.reshape(B * S, D), self.w_qkv_t)
            attn_inputs = (qkv.reshape(B, S, 3 * D),)
            fused = True
        else:
            qp = matmul(query.reshape(B * S, D), self.w_q_t).reshape(B, S, D)
            kp = matmul(key.reshape(B * S, D), self.w_k_t).reshape(B, S, D)
            vp = matmul(value.reshape(B * S, D), self.w_v_t).reshape(B, S, D)
            attn_inputs = (qp, kp, vp)
            fused = False

        bias = None if mask is None else self._mask_to_bias(mask, B, S)

        x, attn = mha_attention(
            attn_inputs, bias, B=B, S=S, n_heads=self.h, d_k=self.d_k,
            fused=fused, return_attn=return_attn, out_dtype=query.dtype,
        )
        out = matmul(x.reshape(B * S, D), self.w_o_t).reshape(B, S, D)
        return out, attn


# ----------------------------------- main ------------------------------------

def _reference(query, key, value, weights, h, d_k, mask=None):
    """Pure-JAX reference replicating the PyTorch forward (eval mode)."""
    B, S, D = query.shape
    proj = [x @ w.T for w, x in zip(weights[:3], (query, key, value))]
    q, k, v = [p.reshape(B, S, h, d_k).transpose(0, 2, 1, 3) for p in proj]
    scores = jnp.einsum("bhqd,bhkd->bhqk", q, k) / math.sqrt(d_k)
    if mask is not None:
        scores = jnp.where(mask == 0, -1e9, scores)
    p_attn = jax.nn.softmax(scores, axis=-1)
    x = jnp.einsum("bhqk,bhkd->bhqd", p_attn, v)
    x = x.transpose(0, 2, 1, 3).reshape(B, S, h * d_k)
    return x @ weights[3].T, p_attn


if __name__ == "__main__":
    B, S, d_model, h = 2, 8, 32, 4
    key0 = jax.random.PRNGKey(0)
    kq, kk, kv, kw = jax.random.split(key0, 4)
    query = jax.random.normal(kq, (B, S, d_model), jnp.float32)
    key_in = jax.random.normal(kk, (B, S, d_model), jnp.float32)
    value = jax.random.normal(kv, (B, S, d_model), jnp.float32)

    mha = MultiheadAttentionPallas(d_model, h, dropout=0.1, seq_len=S + 1, key=kw)

    # 1) cross-attention, no mask (separate projections path)
    out, attn = mha(query, key_in, value, mask=None)
    out = jax.block_until_ready(out)
    attn = jax.block_until_ready(attn)
    ref_out, ref_attn = _reference(query, key_in, value, mha.weights, h,
                                   d_model // h, mask=None)
    assert out.shape == (B, S, d_model)
    assert attn.shape == (B, h, S, S)
    assert jnp.allclose(out, ref_out, atol=1e-4, rtol=1e-4)
    assert jnp.allclose(attn, ref_attn, atol=1e-5, rtol=1e-5)

    # 2) self-attention with a causal mask (fused-QKV path + additive bias)
    mask = jnp.tril(jnp.ones((S, S), jnp.float32))[None, None]
    out2, attn2 = mha(query, query, query, mask=mask)
    out2 = jax.block_until_ready(out2)
    ref_out2, ref_attn2 = _reference(query, query, query, mha.weights, h,
                                     d_model // h, mask=mask)
    assert jnp.allclose(out2, ref_out2, atol=1e-4, rtol=1e-4)
    assert jnp.allclose(attn2, ref_attn2, atol=1e-5, rtol=1e-5)

    # 3) skip the (B,H,S,S) probability writeback entirely
    out3, attn3 = mha(query, query, query, mask=mask, return_attn=False)
    out3 = jax.block_until_ready(out3)
    assert attn3 is None
    assert jnp.allclose(out3, ref_out2, atol=1e-4, rtol=1e-4)

    print("KERNEL_OK")
</pallas_src>

<mosaic_0001>
module attributes {stable_mosaic.version = 11 : i64} {
  func.func @_matmul_kernel(%arg0: i32, %arg1: i32, %arg2: i32, %arg3: memref<16x32xf32, #tpu.memory_space<vmem>>, %arg4: memref<32x32xf32, #tpu.memory_space<vmem>>, %arg5: memref<16x32xf32, #tpu.memory_space<vmem>>, %arg6: memref<16x32xf32, #tpu.memory_space<vmem>>) attributes {dimension_semantics = [#tpu.dimension_semantics<parallel>, #tpu.dimension_semantics<parallel>, #tpu.dimension_semantics<arbitrary>], iteration_bounds = array<i64: 1, 1, 1>, scalar_prefetch = 0 : i64, scratch_operands = 1 : i64, tpu.core_type = #tpu.core_type<tc>, window_params = [{transform_indices = @transform_0, window_bounds = array<i64: 16, 32>}, {transform_indices = @transform_1, window_bounds = array<i64: 32, 32>}, {transform_indices = @transform_2, window_bounds = array<i64: 16, 32>}]} {
    %c0_i32 = arith.constant 0 : i32
    %0 = arith.cmpi eq, %arg2, %c0_i32 : i32
    %1 = arith.extui %0 : i1 to i32
    %c0_i32_0 = arith.constant 0 : i32
    %2 = arith.cmpi ne, %1, %c0_i32_0 : i32
    scf.if %2 {
      %cst_10 = arith.constant 0.000000e+00 : f32
      %12 = vector.broadcast %cst_10 : f32 to vector<16x32xf32>
      %c0_11 = arith.constant 0 : index
      %c0_12 = arith.constant 0 : index
      %13 = vector.load %arg6[%c0_11, %c0_12] : memref<16x32xf32, #tpu.memory_space<vmem>>, vector<16x32xf32>
      tpu.vector_store %arg6[%c0_11, %c0_12], %12 {strides = array<i32>} : memref<16x32xf32, #tpu.memory_space<vmem>>, vector<16x32xf32>,
    } else {
    }
    %c0 = arith.constant 0 : index
    %c0_1 = arith.constant 0 : index
    %3 = vector.load %arg6[%c0, %c0_1] : memref<16x32xf32, #tpu.memory_space<vmem>>, vector<16x32xf32>
    %c0_2 = arith.constant 0 : index
    %c0_3 = arith.constant 0 : index
    %4 = vector.load %arg3[%c0_2, %c0_3] : memref<16x32xf32, #tpu.memory_space<vmem>>, vector<16x32xf32>
    %c0_4 = arith.constant 0 : index
    %c0_5 = arith.constant 0 : index
    %5 = vector.load %arg4[%c0_4, %c0_5] : memref<32x32xf32, #tpu.memory_space<vmem>>, vector<32x32xf32>
    %cst = arith.constant dense<0.000000e+00> : vector<16x32xf32>
    %6 = tpu.matmul %4, %5, %cst {dimension_numbers = #tpu.dot_dimension_numbers<[1], [0], [0], [1], [0, 0, 1, 1], [], []>} : vector<16x32xf32>, vector<32x32xf32>, vector<16x32xf32> -> vector<16x32xf32>
    %7 = arith.addf %3, %6 : vector<16x32xf32>
    %c0_6 = arith.constant 0 : index
    %c0_7 = arith.constant 0 : index
    %8 = vector.load %arg6[%c0_6, %c0_7] : memref<16x32xf32, #tpu.memory_space<vmem>>, vector<16x32xf32>
    tpu.vector_store %arg6[%c0_6, %c0_7], %7 {strides = array<i32>} : memref<16x32xf32, #tpu.memory_space<vmem>>, vector<16x32xf32>,
    %c0_i32_8 = arith.constant 0 : i32
    %9 = arith.cmpi eq, %arg2, %c0_i32_8 : i32
    %10 = arith.extui %9 : i1 to i32
    %c0_i32_9 = arith.constant 0 : i32
    %11 = arith.cmpi ne, %10, %c0_i32_9 : i32
    scf.if %11 {
      %c0_10 = arith.constant 0 : index
      %c0_11 = arith.constant 0 : index
      %12 = vector.load %arg6[%c0_10, %c0_11] : memref<16x32xf32, #tpu.memory_space<vmem>>, vector<16x32xf32>
      %c0_12 = arith.constant 0 : index
      %c0_13 = arith.constant 0 : index
      %13 = vector.load %arg5[%c0_12, %c0_13] : memref<16x32xf32, #tpu.memory_space<vmem>>, vector<16x32xf32>
      tpu.vector_store %arg5[%c0_12, %c0_13], %12 {strides = array<i32>} : memref<16x32xf32, #tpu.memory_space<vmem>>, vector<16x32xf32>,
    } else {
    }
    return
  }
  func.func @transform_0(%arg0: i32, %arg1: i32, %arg2: i32) -> (i32, i32) {
    %c0_i32 = arith.constant 0 : i32
    return %arg0, %arg2 : i32, i32
  }
  func.func @transform_1(%arg0: i32, %arg1: i32, %arg2: i32) -> (i32, i32) {
    %c0_i32 = arith.constant 0 : i32
    return %arg2, %arg1 : i32, i32
  }
  func.func @transform_2(%arg0: i32, %arg1: i32, %arg2: i32) -> (i32, i32) {
    %c0_i32 = arith.constant 0 : i32
    return %arg0, %arg1 : i32, i32
  }
}

</mosaic_0001>

<llo_original>
// kernel: tpu_custom_call.1
$region0: #{tpu_custom_call.1}
  #allocation0 [shape = 'u32[]', space=smem, size = 0x4, offset = 0x4, fixed_abs, tag = 'smem constant byte address 0x4 - core index']
  #allocation1 [shape = 'u32[144,128]{1,0:T(1,128)}', space=vmem, size = 0x12000, scoped, tag = 'internal scratch']
  #allocation2 [shape = 'f32[16,32]{1,0:T(8,128)}', space=vmem, size = 0x2000, scoped, tag = 'scratch operand']
  %s0 = inlined_call_operand.hbm [shape: f32[16,32], index: 0, kind: input, shape index: {}]
  %s1 = inlined_call_operand.hbm [shape: f32[32,32], index: 1, kind: input, shape index: {}]
  %s2 = inlined_call_operand.hbm [shape: f32[16,32], index: 2, kind: output, shape index: {}]
  %s3 = sld [smem:[#allocation0]]
  $region34: #{tpu_custom_call.1} parent=0
    _
  %s5 = ssub.s32 1, %s3
  %s6 = scalar_select 0, %s5, %s3
  $region1: #{tpu_custom_call.1} parent=0
    #allocation3 [shape = 'u8[8192]{0}', space=vmem, size = 0x2000, scoped, tag = 'input window, operand 0, single buffered']
    #allocation4 [shape = 's32[1]{0}', space=sflag, size = 0x4, scoped, tag = 'scoped memory for tpu_custom_call.1']
    #allocation5 [shape = 's32[1]{0}', space=sflag, size = 0x4, scoped, tag = 'scoped memory for tpu_custom_call.1']
    #allocation6 [shape = 'u8[16384]{0}', space=vmem, size = 0x4000, scoped, tag = 'input window, operand 1, single buffered']
    #allocation7 [shape = 's32[1]{0}', space=sflag, size = 0x4, scoped, tag = 'scoped memory for tpu_custom_call.1']
    #allocation8 [shape = 'u8[8192]{0}', space=vmem, size = 0x2000, scoped, tag = 'output window, operand 0, single buffered']
    %7 = vsyncpa [#allocation4], 0
    %8 = vsyncpa [#allocation7], 0
    %9 = vsyncpa [#allocation5], 0
    // Predicated region
    $region2: #{tpu_custom_call.1} parent=1 // pred_check
      _
    $region3: #{tpu_custom_call.1} parent=1 // pred_check_branch
      %11 = sbr.rel (0) target = $region5
    $region4: #{tpu_custom_call.1} parent=1 // pred_region
      %s13 = ssub.s32 256, 256
      %14 = vsyncadd [#allocation4], %s13
      %s15 = sshll.u32 [#allocation3], 4
      %s16 = int_to_ptr.vmem [resolvable:$true] %s15
      %21 = dma.hbm_to_vmem [thread:$0]  %s0, 256, %s16, [#allocation4], 128, 128, 8
    $region5: #{tpu_custom_call.1} parent=1 // pred_fallthru
      _
    // Predicated region
    $region6: #{tpu_custom_call.1} parent=1 // pred_check
      _
    $region7: #{tpu_custom_call.1} parent=1 // pred_check_branch
      %23 = sbr.rel (0) target = $region9
    $region8: #{tpu_custom_call.1} parent=1 // pred_region
      %s25 = ssub.s32 512, 512
      %26 = vsyncadd [#allocation7], %s25
      %s27 = sshll.u32 [#allocation6], 4
      %s28 = int_to_ptr.vmem [resolvable:$true] %s27
      %33 = dma.hbm_to_vmem [thread:$0]  %s1, 512, %s28, [#allocation7], 128, 128, 8
    $region9: #{tpu_custom_call.1} parent=1 // pred_fallthru
      _
    // Predicated region
    $region10: #{tpu_custom_call.1} parent=1 // pred_check
      _
    $region11: #{tpu_custom_call.1} parent=1 // pred_check_branch
      %35 = sbr.rel (0) target = $region13
    $region12: #{tpu_custom_call.1} parent=1 // pred_region
      %36 = dma.done [#allocation4], 256
    $region13: #{tpu_custom_call.1} parent=1 // pred_fallthru
      _
    // Predicated region
    $region14: #{tpu_custom_call.1} parent=1 // pred_check
      _
    $region15: #{tpu_custom_call.1} parent=1 // pred_check_branch
      %38 = sbr.rel (0) target = $region17
    $region16: #{tpu_custom_call.1} parent=1 // pred_region
      %39 = dma.done [#allocation7], 512
    $region17: #{tpu_custom_call.1} parent=1 // pred_fallthru
      _
    %p40 = scmp.eq.s32.totalorder 0, 0
    // Predicated region
    $region18: #{tpu_custom_call.1} parent=1 // pred_check
      %p41 = pneg %p40
    $region19: #{tpu_custom_call.1} parent=1 // pred_check_branch
      %43 = sbr.rel (%p41) target = $region21
    $region20: #{tpu_custom_call.1} parent=1 // pred_region
      %vm44 = vcmask 261120
      %45 = vst.msk [vmem:[#allocation2] sm:$0xff] %vm44, 0.0
      %46 = vst.msk [vmem:[#allocation2 + $0x8] sm:$0xff] %vm44, 0.0
    $region21: #{tpu_custom_call.1} parent=1 // pred_fallthru
      _
    %v47 = vld [vmem:[#allocation2] sm:$0xff]
    %v48 = vld [vmem:[#allocation2 + $0x8] sm:$0xff]
    %v49 = vld [vmem:[#allocation3] sm:$0xff]
    %v50 = vld [vmem:[#allocation3 + $0x8] sm:$0xff]
    %v51 = vld [vmem:[#allocation6] sm:$0xff]
    %v52 = vld [vmem:[#allocation6 + $0x8] sm:$0xff]
    %v53 = vld [vmem:[#allocation6 + $0x10] sm:$0xff]
    %v54 = vld [vmem:[#allocation6 + $0x18] sm:$0xff]
    %vm55 = vcmask 261120
    %v57 = vsel %vm55, %v49, 0
    %v60 = vsel %vm55, %v50, 0
    %62 = vmatprep.subr.mxu0 0.0
    %63 = vmatpush1.msra.mxu0 0.0
    %64 = vmatprep.subr.mxu0 0.0
    %65 = vmatpush1.msra.mxu0 0.0
    %66 = vmatprep.subr.mxu0 0.0
    %67 = vmatpush1.msra.mxu0 0.0
    %68 = vmatprep.subr.mxu0 0.0
    %69 = vmatpush1.msra.mxu0 0.0
    %70 = vmatprep.subr.mxu0 0.0
    %71 = vmatpush1.msra.mxu0 0.0
    %72 = vmatprep.subr.mxu0 0.0
    %73 = vmatpush1.msra.mxu0 0.0
    %74 = vmatprep.subr.mxu0 0.0
    %75 = vmatpush1.msra.mxu0 0.0
    %76 = vmatprep.subr.mxu0 0.0
    %77 = vmatpush1.msra.mxu0 0.0
    %78 = vmatprep.subr.mxu0 0.0
    %79 = vmatpush1.msra.mxu0 0.0
    %80 = vmatprep.subr.mxu0 0.0
    %81 = vmatpush1.msra.mxu0 0.0
    %82 = vmatprep.subr.mxu0 0.0
    %83 = vmatpush1.msra.mxu0 0.0
    %84 = vmatprep.subr.mxu0 0.0
    %85 = vmatpush1.msra.mxu0 0.0
    %86 = vmatprep.subr.mxu0 0.0
    %87 = vmatpush1.msra.mxu0 %v54
    %88 = vmatprep.subr.mxu0 0.0
    %89 = vmatpush1.msra.mxu0 %v53
    %90 = vmatprep.subr.mxu0 0.0
    %91 = vmatpush1.msra.mxu0 %v52
    %92 = vmatprep.subr.mxu0 0.0
    %93 = vmatpush1.msra.mxu0 %v51
    %94 = vmatprep.subr.mxu0 0.0
    %95 = vmatpush2.msra.mxu0 0.0
    %96 = vmatprep.subr.mxu0 0.0
    %97 = vmatpush2.msra.mxu0 0.0
    %98 = vmatprep.subr.mxu0 0.0
    %99 = vmatpush2.msra.mxu0 0.0
    %100 = vmatprep.subr.mxu0 0.0
    %101 = vmatpush2.msra.mxu0 0.0
    %102 = vmatprep.subr.mxu0 0.0
    %103 = vmatpush2.msra.mxu0 0.0
    %104 = vmatprep.subr.mxu0 0.0
    %105 = vmatpush2.msra.mxu0 0.0
    %106 = vmatprep.subr.mxu0 0.0
    %107 = vmatpush2.msra.mxu0 0.0
    %108 = vmatprep.subr.mxu0 0.0
    %109 = vmatpush2.msra.mxu0 0.0
    %110 = vmatprep.subr.mxu0 0.0
    %111 = vmatpush2.msra.mxu0 0.0
    %112 = vmatprep.subr.mxu0 0.0
    %113 = vmatpush2.msra.mxu0 0.0
    %114 = vmatprep.subr.mxu0 0.0
    %115 = vmatpush2.msra.mxu0 0.0
    %116 = vmatprep.subr.mxu0 0.0
    %117 = vmatpush2.msra.mxu0 0.0
    %118 = vmatprep.subr.mxu0 0.0
    %119 = vmatpush2.msra.mxu0 0.0
    %120 = vmatprep.subr.mxu0 0.0
    %121 = vmatpush2.msra.mxu0 0.0
    %122 = vmatprep.subr.mxu0 0.0
    %123 = vmatpush2.msra.mxu0 0.0
    %124 = vmatprep.subr.mxu0 0.0
    %125 = vmatpush2.msra.mxu0 0.0
    %126 = vmatprep.mubr.f32.mxu0 0.0
    %127 = vmatmul.mubr.f32.gmra.mxu0 %v57
    %v128 = vpop.f32.mrf.mxu0
    %v129 = vadd.f32 0.0, %v128
    %v130 = vpop.f32.mrf.mxu0
    %131 = vmatprep.mubr.f32.mxu0 0.0
    %132 = vmatmul.mubr.f32.gmra.mxu0 %v60
    %v133 = vpop.f32.mrf.mxu0
    %v134 = vadd.f32 0.0, %v133
    %v135 = vpop.f32.mrf.mxu0
    %136 = vdwg.mxu0
    %v137 = vadd.f32 %v47, %v129
    %v138 = vadd.f32 %v48, %v134
    %139 = vst.msk [vmem:[#allocation2] sm:$0xff] %vm55, %v137
    %140 = vst.msk [vmem:[#allocation2 + $0x8] sm:$0xff] %vm55, %v138
    // Predicated region
    $region22: #{tpu_custom_call.1} parent=1 // pred_check
      %p141 = pneg %p40
    $region23: #{tpu_custom_call.1} parent=1 // pred_check_branch
      %143 = sbr.rel (%p141) target = $region25
    $region24: #{tpu_custom_call.1} parent=1 // pred_region
      %v144 = vld [vmem:[#allocation2] sm:$0xff]
      %v145 = vld [vmem:[#allocation2 + $0x8] sm:$0xff]
      %146 = vst.msk [vmem:[#allocation8] sm:$0xff] %vm55, %v144
      %147 = vst.msk [vmem:[#allocation8 + $0x8] sm:$0xff] %vm55, %v145
    $region25: #{tpu_custom_call.1} parent=1 // pred_fallthru
      _
    // Predicated region
    $region26: #{tpu_custom_call.1} parent=1 // pred_check
      _
    $region27: #{tpu_custom_call.1} parent=1 // pred_check_branch
      %149 = sbr.rel (0) target = $region29
    $region28: #{tpu_custom_call.1} parent=1 // pred_region
      %s151 = ssub.s32 256, 256
      %152 = vsyncadd [#allocation5], %s151
      %s153 = sshll.u32 [#allocation8], 4
      %s154 = int_to_ptr.vmem [resolvable:$true] %s153
      %159 = dma.vmem_to_hbm [thread:$0]  %s154, 256, %s2, [#allocation5], 128, 128, 8
    $region29: #{tpu_custom_call.1} parent=1 // pred_fallthru
      _
    // Predicated region
    $region30: #{tpu_custom_call.1} parent=1 // pred_check
      _
    $region31: #{tpu_custom_call.1} parent=1 // pred_check_branch
      %161 = sbr.rel (0) target = $region33
    $region32: #{tpu_custom_call.1} parent=1 // pred_region
      %162 = dma.done [#allocation5], 256
    $region33: #{tpu_custom_call.1} parent=1 // pred_fallthru
      _
    %163 = vsyncpa [#allocation4], 1
    %164 = vsyncpa [#allocation7], 1
    %165 = vsyncpa [#allocation5], 1

</llo_original>
